<compile_context>
chip_gen: v7x
topology: tpu7x:2x2x1
jax: 0.10.0
libtpu: 0.0.40
codegen_flags: <defaults>
</compile_context>

<pallas_src>
import math
from functools import partial

import jax
import jax.numpy as jnp
from jax.experimental import pallas as pl
from jax.experimental.pallas import tpu as pltpu


# ---------------------------------------------------------------------------
# Kernel
# ---------------------------------------------------------------------------
def sigma_block_kernel(
    sigma_ref,    # (block_b, 1)        f32   VMEM  this grid step's log10-sigmas
    misc_ref,     # (5, W)              f32   VMEM  rows: 2pi*freq2, phase, b1, b2, b3
    w1_ref,       # (2*n_rff, 4*n_rff)  bf16  VMEM
    w2_ref,       # (4*n_rff, 8*n_rff)  bf16  VMEM
    w3_ref,       # (8*n_rff, n_dim)    bf16  VMEM
    alphas_ref,   # (3,)                f32   SMEM  PReLU alphas (layer 1..3)
    out_ref,      # (block_b, n_dim)          VMEM
):
    two_n_rff = w1_ref.shape[0]
    h1 = w1_ref.shape[1]
    h2 = w2_ref.shape[1]
    n_dim = w3_ref.shape[1]

    # Static, lane-0-aligned slices of the packed misc array.
    freq2 = misc_ref[0:1, 0:two_n_rff]   # (1, 2*n_rff)  already scaled by 2*pi
    phase = misc_ref[1:2, 0:two_n_rff]   # (1, 2*n_rff)  0 for sin half, pi/2 for cos half
    b1 = misc_ref[2:3, 0:h1]             # (1, h1)
    b2 = misc_ref[3:4, 0:h2]             # (1, h2)
    b3 = misc_ref[4:5, 0:n_dim]          # (1, n_dim)

    a1 = alphas_ref[0]
    a2 = alphas_ref[1]
    a3 = alphas_ref[2]

    # Fused random Fourier features: sin(2*pi*sigma*f) / cos(2*pi*sigma*f) as a single
    # sin() over a phase-offset vector -> no lane concatenate, one EUP stream.
    p = sigma_ref[...] * freq2 + phase          # (block_b, 2*n_rff)  f32
    rff = jnp.sin(p)

    # layer1: bf16 MXU matmul, f32 accumulate; bias + PReLU in f32 on the VPU.
    g = jnp.dot(rff.astype(jnp.bfloat16), w1_ref[...],
                preferred_element_type=jnp.float32) + b1
    g = jnp.where(g >= 0.0, g, a1 * g)

    # layer2
    g = jnp.dot(g.astype(jnp.bfloat16), w2_ref[...],
                preferred_element_type=jnp.float32) + b2
    g = jnp.where(g >= 0.0, g, a2 * g)

    # layer3
    g = jnp.dot(g.astype(jnp.bfloat16), w3_ref[...],
                preferred_element_type=jnp.float32) + b3
    g = jnp.where(g >= 0.0, g, a3 * g)

    out_ref[...] = g.astype(out_ref.dtype)


# ---------------------------------------------------------------------------
# One-time parameter packing (hoisted out of the per-call path)
# ---------------------------------------------------------------------------
def pack_params(params):
    """Cast weights to bf16 and pack freq/phase/biases into a single f32 array."""
    n_rff = params["freq"].shape[0]
    h1 = params["w1"].shape[1]
    h2 = params["w2"].shape[1]
    n_dim = params["w3"].shape[1]

    width = max(2 * n_rff, h1, h2, n_dim)
    width = 128 * (-(-width // 128))  # round up to a lane multiple

    def row(v):
        v = jnp.asarray(v, jnp.float32).reshape(-1)
        return jnp.pad(v, (0, width - v.shape[0]))

    freq = jnp.asarray(params["freq"], jnp.float32)
    freq2 = (2.0 * math.pi) * jnp.concatenate([freq, freq])                 # (2*n_rff,)
    phase = jnp.concatenate([jnp.zeros((n_rff,), jnp.float32),
                             jnp.full((n_rff,), 0.5 * math.pi, jnp.float32)])

    misc = jnp.stack(
        [row(freq2), row(phase), row(params["b1"]), row(params["b2"]), row(params["b3"])],
        axis=0,
    )  # (5, width) f32

    alphas = jnp.stack(
        [jnp.asarray(params["a1"], jnp.float32).reshape(()),
         jnp.asarray(params["a2"], jnp.float32).reshape(()),
         jnp.asarray(params["a3"], jnp.float32).reshape(())],
        axis=0,
    )  # (3,) f32

    return dict(
        misc=misc,
        w1=params["w1"].astype(jnp.bfloat16),
        w2=params["w2"].astype(jnp.bfloat16),
        w3=params["w3"].astype(jnp.bfloat16),
        alphas=alphas,
    )


# ---------------------------------------------------------------------------
# Wrapper
# ---------------------------------------------------------------------------
@partial(jax.jit, static_argnames=("block_b", "out_dtype"))
def sigma_block_pallas(log10_sigma, packed, *, block_b=128, out_dtype=jnp.float32):
    """log10_sigma: (B,) f32  ->  (B, n_dim) out_dtype."""
    assert block_b % 8 == 0, "block_b must be a multiple of 8 (f32 sublane)"
    B = log10_sigma.shape[0]
    misc = packed["misc"]
    w1, w2, w3 = packed["w1"], packed["w2"], packed["w3"]
    alphas = packed["alphas"]
    n_dim = w3.shape[1]
    n_rff = w1.shape[0] // 2

    num_blocks = -(-B // block_b)
    B_pad = num_blocks * block_b

    sigma_col = log10_sigma.astype(jnp.float32).reshape(B, 1)
    if B_pad != B:
        sigma_col = jnp.pad(sigma_col, ((0, B_pad - B), (0, 0)))

    flops = 2 * B_pad * (w1.shape[0] * w1.shape[1]
                         + w2.shape[0] * w2.shape[1]
                         + w3.shape[0] * w3.shape[1])
    transcendentals = 2 * B_pad * n_rff  # one sin per RFF lane
    out_bytes = jnp.dtype(out_dtype).itemsize
    bytes_accessed = (
        2 * (w1.size + w2.size + w3.size)      # bf16 weights
        + 4 * misc.size + 4 * alphas.size
        + 4 * B_pad                            # sigmas in
        + out_bytes * B_pad * n_dim            # activations out
    )

    out = pl.pallas_call(
        sigma_block_kernel,
        out_shape=jax.ShapeDtypeStruct((B_pad, n_dim), out_dtype),
        grid=(num_blocks,),
        in_specs=[
            pl.BlockSpec((block_b, 1), lambda i: (i, 0)),        # sigma tile per step
            pl.BlockSpec(misc.shape, lambda i: (0, 0)),          # packed freq/phase/biases
            pl.BlockSpec(w1.shape, lambda i: (0, 0)),            # weights stay VMEM-resident
            pl.BlockSpec(w2.shape, lambda i: (0, 0)),
            pl.BlockSpec(w3.shape, lambda i: (0, 0)),
            pl.BlockSpec(memory_space=pltpu.MemorySpace.SMEM),   # alphas as SMEM scalars
        ],
        out_specs=pl.BlockSpec((block_b, n_dim), lambda i: (i, 0)),
        compiler_params=pltpu.CompilerParams(
            dimension_semantics=("parallel",),
        ),
        cost_estimate=pl.CostEstimate(
            flops=int(flops),
            transcendentals=int(transcendentals),
            bytes_accessed=int(bytes_accessed),
        ),
    )(sigma_col, misc, w1, w2, w3, alphas)

    return out[:B]


# ---------------------------------------------------------------------------
# Synthetic params (match PyTorch module shapes; Linear weights stored (in, out))
# ---------------------------------------------------------------------------
def init_params(key, n_rff=32, n_dim=256, scale=16.0):
    ks = jax.random.split(key, 4)
    dims = [2 * n_rff, 4 * n_rff, 8 * n_rff, n_dim]

    def linear(k, fan_in, fan_out):
        kw, kb = jax.random.split(k)
        bound = 1.0 / math.sqrt(fan_in)
        w = jax.random.uniform(kw, (fan_in, fan_out), jnp.float32, -bound, bound)
        b = jax.random.uniform(kb, (fan_out,), jnp.float32, -bound, bound)
        return w, b

    freq = scale * jax.random.normal(ks[0], (n_rff,), jnp.float32)
    w1, b1 = linear(ks[1], dims[0], dims[1])
    w2, b2 = linear(ks[2], dims[1], dims[2])
    w3, b3 = linear(ks[3], dims[2], dims[3])
    alpha = jnp.float32(0.25)  # PyTorch PReLU default init (num_parameters=1)
    return dict(
        freq=freq,
        w1=w1, b1=b1, a1=alpha,
        w2=w2, b2=b2, a2=alpha,
        w3=w3, b3=b3, a3=alpha,
    )


def sigma_block_ref(log10_sigma, params):
    """Pure-JAX f32 reference mirroring the PyTorch forward exactly."""
    freq = params["freq"]
    p = 2.0 * math.pi * freq[None, :] * log10_sigma[:, None]
    rff = jnp.concatenate([jnp.sin(p), jnp.cos(p)], axis=-1)

    def lin_prelu(x, w, b, a):
        y = x @ w + b
        return jnp.where(y >= 0.0, y, a * y)

    g = lin_prelu(rff, params["w1"], params["b1"], params["a1"])
    g = lin_prelu(g, params["w2"], params["b2"], params["a2"])
    g = lin_prelu(g, params["w3"], params["b3"], params["a3"])
    return g


if __name__ == "__main__":
    key = jax.random.PRNGKey(0)
    k_param, k_in = jax.random.split(key)

    n_rff, n_dim, scale = 32, 256, 16.0
    B = 20  # not a multiple of block_b on purpose: exercises grid + padding path

    params = init_params(k_param, n_rff=n_rff, n_dim=n_dim, scale=scale)
    packed = pack_params(params)

    # log10(sigma) values roughly in [-2, 1]
    log10_sigma = jax.random.uniform(k_in, (B,), jnp.float32, -2.0, 1.0)

    # Small block_b here just to exercise the multi-step grid at tiny shapes;
    # production default is 128 (sweep 128/256/512 at large B).
    out = sigma_block_pallas(log10_sigma, packed, block_b=16)
    out = jax.block_until_ready(out)

    ref = sigma_block_ref(log10_sigma, params)
    assert out.shape == (B, n_dim), out.shape
    # bf16 matmul path vs f32 reference -> relaxed tolerance
    max_err = float(jnp.max(jnp.abs(out - ref)))
    assert jnp.allclose(out, ref, atol=3e-2, rtol=3e-2), max_err

    print("KERNEL_OK")
</pallas_src>

<mosaic_0001>
module attributes {stable_mosaic.version = 11 : i64} {
  func.func @sigma_block_kernel(%arg0: i32, %arg1: memref<16x1xf32, #tpu.memory_space<vmem>>, %arg2: memref<5x256xf32, #tpu.memory_space<vmem>>, %arg3: memref<64x128xbf16, #tpu.memory_space<vmem>>, %arg4: memref<128x256xbf16, #tpu.memory_space<vmem>>, %arg5: memref<256x256xbf16, #tpu.memory_space<vmem>>, %arg6: memref<3xf32, #tpu.memory_space<smem>>, %arg7: memref<16x256xf32, #tpu.memory_space<vmem>>) attributes {dimension_semantics = [#tpu.dimension_semantics<parallel>], iteration_bounds = array<i64: 2>, scalar_prefetch = 0 : i64, scratch_operands = 0 : i64, tpu.core_type = #tpu.core_type<tc>, window_params = [{transform_indices = @transform_0, window_bounds = array<i64: 16, 1>}, {pipeline_mode = #tpu.pipeline_mode<synchronous>, transform_indices = @transform_1, window_bounds = array<i64: 5, 256>}, {pipeline_mode = #tpu.pipeline_mode<synchronous>, transform_indices = @transform_2, window_bounds = array<i64: 64, 128>}, {pipeline_mode = #tpu.pipeline_mode<synchronous>, transform_indices = @transform_3, window_bounds = array<i64: 128, 256>}, {pipeline_mode = #tpu.pipeline_mode<synchronous>, transform_indices = @transform_4, window_bounds = array<i64: 256, 256>}, {transform_indices = @transform_5, window_bounds = array<i64: 3>}, {transform_indices = @transform_6, window_bounds = array<i64: 16, 256>}]} {
    %c0 = arith.constant 0 : index
    %c0_0 = arith.constant 0 : index
    %0 = vector.load %arg2[%c0, %c0_0] : memref<5x256xf32, #tpu.memory_space<vmem>>, vector<1x64xf32>
    %c1 = arith.constant 1 : index
    %c0_1 = arith.constant 0 : index
    %1 = vector.load %arg2[%c1, %c0_1] : memref<5x256xf32, #tpu.memory_space<vmem>>, vector<1x64xf32>
    %c2 = arith.constant 2 : index
    %c0_2 = arith.constant 0 : index
    %2 = vector.load %arg2[%c2, %c0_2] : memref<5x256xf32, #tpu.memory_space<vmem>>, vector<1x128xf32>
    %c3 = arith.constant 3 : index
    %c0_3 = arith.constant 0 : index
    %3 = vector.load %arg2[%c3, %c0_3] : memref<5x256xf32, #tpu.memory_space<vmem>>, vector<1x256xf32>
    %c4 = arith.constant 4 : index
    %c0_4 = arith.constant 0 : index
    %4 = vector.load %arg2[%c4, %c0_4] : memref<5x256xf32, #tpu.memory_space<vmem>>, vector<1x256xf32>
    %c0_5 = arith.constant 0 : index
    %5 = memref.load %arg6[%c0_5] : memref<3xf32, #tpu.memory_space<smem>>
    %c1_6 = arith.constant 1 : index
    %6 = memref.load %arg6[%c1_6] : memref<3xf32, #tpu.memory_space<smem>>
    %c2_7 = arith.constant 2 : index
    %7 = memref.load %arg6[%c2_7] : memref<3xf32, #tpu.memory_space<smem>>
    %c0_8 = arith.constant 0 : index
    %c0_9 = arith.constant 0 : index
    %8 = vector.load %arg1[%c0_8, %c0_9] : memref<16x1xf32, #tpu.memory_space<vmem>>, vector<16x1xf32>
    %9 = vector.broadcast %8 : vector<16x1xf32> to vector<16x64xf32>
    %10 = vector.broadcast %0 : vector<1x64xf32> to vector<16x64xf32>
    %11 = arith.mulf %9, %10 : vector<16x64xf32>
    %12 = vector.broadcast %1 : vector<1x64xf32> to vector<16x64xf32>
    %13 = arith.addf %11, %12 : vector<16x64xf32>
    %14 = math.sin %13 : vector<16x64xf32>
    %15 = arith.truncf %14 : vector<16x64xf32> to vector<16x64xbf16>
    %c0_10 = arith.constant 0 : index
    %c0_11 = arith.constant 0 : index
    %16 = vector.load %arg3[%c0_10, %c0_11] : memref<64x128xbf16, #tpu.memory_space<vmem>>, vector<64x128xbf16>
    %cst = arith.constant dense<0.000000e+00> : vector<16x128xf32>
    %17 = tpu.matmul %15, %16, %cst {dimension_numbers = #tpu.dot_dimension_numbers<[1], [0], [0], [1], [0, 0, 1, 1], [], []>} : vector<16x64xbf16>, vector<64x128xbf16>, vector<16x128xf32> -> vector<16x128xf32>
    %18 = vector.broadcast %2 : vector<1x128xf32> to vector<16x128xf32>
    %19 = arith.addf %17, %18 : vector<16x128xf32>
    %cst_12 = arith.constant 0.000000e+00 : f32
    %20 = vector.broadcast %cst_12 : f32 to vector<16x128xf32>
    %21 = arith.cmpf oge, %19, %20 : vector<16x128xf32>
    %22 = vector.broadcast %5 : f32 to vector<16x128xf32>
    %23 = arith.mulf %22, %19 : vector<16x128xf32>
    %24 = arith.select %21, %19, %23 : vector<16x128xi1>, vector<16x128xf32>
    %25 = arith.truncf %24 : vector<16x128xf32> to vector<16x128xbf16>
    %c0_13 = arith.constant 0 : index
    %c0_14 = arith.constant 0 : index
    %26 = vector.load %arg4[%c0_13, %c0_14] : memref<128x256xbf16, #tpu.memory_space<vmem>>, vector<128x256xbf16>
    %cst_15 = arith.constant dense<0.000000e+00> : vector<16x256xf32>
    %27 = tpu.matmul %25, %26, %cst_15 {dimension_numbers = #tpu.dot_dimension_numbers<[1], [0], [0], [1], [0, 0, 1, 1], [], []>} : vector<16x128xbf16>, vector<128x256xbf16>, vector<16x256xf32> -> vector<16x256xf32>
    %28 = vector.broadcast %3 : vector<1x256xf32> to vector<16x256xf32>
    %29 = arith.addf %27, %28 : vector<16x256xf32>
    %cst_16 = arith.constant 0.000000e+00 : f32
    %30 = vector.broadcast %cst_16 : f32 to vector<16x256xf32>
    %31 = arith.cmpf oge, %29, %30 : vector<16x256xf32>
    %32 = vector.broadcast %6 : f32 to vector<16x256xf32>
    %33 = arith.mulf %32, %29 : vector<16x256xf32>
    %34 = arith.select %31, %29, %33 : vector<16x256xi1>, vector<16x256xf32>
    %35 = arith.truncf %34 : vector<16x256xf32> to vector<16x256xbf16>
    %c0_17 = arith.constant 0 : index
    %c0_18 = arith.constant 0 : index
    %36 = vector.load %arg5[%c0_17, %c0_18] : memref<256x256xbf16, #tpu.memory_space<vmem>>, vector<256x256xbf16>
    %cst_19 = arith.constant dense<0.000000e+00> : vector<16x256xf32>
    %37 = tpu.matmul %35, %36, %cst_19 {dimension_numbers = #tpu.dot_dimension_numbers<[1], [0], [0], [1], [0, 0, 1, 1], [], []>} : vector<16x256xbf16>, vector<256x256xbf16>, vector<16x256xf32> -> vector<16x256xf32>
    %38 = vector.broadcast %4 : vector<1x256xf32> to vector<16x256xf32>
    %39 = arith.addf %37, %38 : vector<16x256xf32>
    %cst_20 = arith.constant 0.000000e+00 : f32
    %40 = vector.broadcast %cst_20 : f32 to vector<16x256xf32>
    %41 = arith.cmpf oge, %39, %40 : vector<16x256xf32>
    %42 = vector.broadcast %7 : f32 to vector<16x256xf32>
    %43 = arith.mulf %42, %39 : vector<16x256xf32>
    %44 = arith.select %41, %39, %43 : vector<16x256xi1>, vector<16x256xf32>
    %c0_21 = arith.constant 0 : index
    %c0_22 = arith.constant 0 : index
    %45 = vector.load %arg7[%c0_21, %c0_22] : memref<16x256xf32, #tpu.memory_space<vmem>>, vector<16x256xf32>
    tpu.vector_store %arg7[%c0_21, %c0_22], %44 {strides = array<i32>} : memref<16x256xf32, #tpu.memory_space<vmem>>, vector<16x256xf32>,
    return
  }
  func.func @transform_0(%arg0: i32) -> (i32, i32) {
    %c0_i32 = arith.constant 0 : i32
    %c0_i32_0 = arith.constant 0 : i32
    return %arg0, %c0_i32 : i32, i32
  }
  func.func @transform_1(%arg0: i32) -> (i32, i32) {
    %c0_i32 = arith.constant 0 : i32
    %c0_i32_0 = arith.constant 0 : i32
    %c0_i32_1 = arith.constant 0 : i32
    return %c0_i32, %c0_i32_0 : i32, i32
  }
  func.func @transform_2(%arg0: i32) -> (i32, i32) {
    %c0_i32 = arith.constant 0 : i32
    %c0_i32_0 = arith.constant 0 : i32
    %c0_i32_1 = arith.constant 0 : i32
    return %c0_i32, %c0_i32_0 : i32, i32
  }
  func.func @transform_3(%arg0: i32) -> (i32, i32) {
    %c0_i32 = arith.constant 0 : i32
    %c0_i32_0 = arith.constant 0 : i32
    %c0_i32_1 = arith.constant 0 : i32
    return %c0_i32, %c0_i32_0 : i32, i32
  }
  func.func @transform_4(%arg0: i32) -> (i32, i32) {
    %c0_i32 = arith.constant 0 : i32
    %c0_i32_0 = arith.constant 0 : i32
    %c0_i32_1 = arith.constant 0 : i32
    return %c0_i32, %c0_i32_0 : i32, i32
  }
  func.func @transform_5(%arg0: i32) -> i32 {
    %c0_i32 = arith.constant 0 : i32
    %c0_i32_0 = arith.constant 0 : i32
    return %c0_i32 : i32
  }
  func.func @transform_6(%arg0: i32) -> (i32, i32) {
    %c0_i32 = arith.constant 0 : i32
    %c0_i32_0 = arith.constant 0 : i32
    return %arg0, %c0_i32 : i32, i32
  }
}

</mosaic_0001>

<llo_original>
// kernel: sigma_block_pallas.1
$region0: #{sigma_block_pallas.1}
  #allocation0 [shape = 'u32[]', space=smem, size = 0x4, offset = 0x4, fixed_abs, tag = 'smem constant byte address 0x4 - core index']
  #allocation1 [shape = 'u32[144,128]{1,0:T(1,128)}', space=vmem, size = 0x12000, scoped, tag = 'internal scratch']
  %s0 = inlined_call_operand.vmem [shape: f32[32,1], index: 0, kind: input, shape index: {}]
  %s1 = inlined_call_operand.vmem [shape: f32[5,256], index: 1, kind: input, shape index: {}]
  %s2 = inlined_call_operand.vmem [shape: bf16[64,128], index: 2, kind: input, shape index: {}]
  %s3 = inlined_call_operand.hbm [shape: bf16[128,256], index: 3, kind: input, shape index: {}]
  %s4 = inlined_call_operand.hbm [shape: bf16[256,256], index: 4, kind: input, shape index: {}]
  %s5 = inlined_call_operand.vmem [shape: f32[3], index: 5, kind: input, shape index: {}]
  %s6 = inlined_call_operand.vmem [shape: f32[32,256], index: 6, kind: output, shape index: {}]
  %s7 = sld [smem:[#allocation0]]
  $region69: #{sigma_block_pallas.1} parent=0
    _
  %s9 = ssub.s32 1, %s7
  %s10 = scalar_select 0, %s9, %s7
  $region1: #{sigma_block_pallas.1} parent=0
    #allocation2 [shape = 'u8[65536]{0}', space=vmem, size = 0x10000, scoped, tag = 'input window, operand 3, single buffered']
    #allocation3 [shape = 's32[2]{0}', space=sflag, size = 0x8, scoped, tag = 'scoped memory for sigma_block_pallas.1']
    #allocation4 [shape = 's32[2]{0}', space=sflag, size = 0x8, scoped, tag = 'scoped memory for sigma_block_pallas.1']
    #allocation5 [shape = 'u8[131072]{0}', space=vmem, size = 0x20000, scoped, tag = 'input window, operand 4, single buffered']
    #allocation6 [shape = 's32[1]{0}', space=sflag, size = 0x4, scoped, tag = 'scoped memory for sigma_block_pallas.1']
    #allocation7 [shape = 'u8[512]{0}', space=smem, size = 0x200, scoped, tag = 'input window, operand 5, single buffered']
    %11 = vsyncpa [#allocation3], 0
    %12 = vsyncpa [#allocation6], 0
    %13 = vsyncpa [#allocation4], 0
    loop: start=0, step=1, limit=4
    $region2: #{sigma_block_pallas.1} parent=1 // loop_pre_header
      _
    $region3: #{sigma_block_pallas.1} parent=1 // loop_header
      %s15 = sphi 0, %s19
      %p16 = scmp.ge.s32.totalorder %s15, 4
      %s25 = sphi 0, %s27
      %s28 = sphi 0, %s25
      %s29 = sphi 0, %s28
      %s45 = sphi 0, %s29
      %s49 = sphi 0, %s49
      %s51 = sphi 0, %s49
      %s52 = sphi 0, %s51
      %s66 = sphi 0, %s52
      %s70 = sphi 0, %s70
      %s72 = sphi 0, %s70
      %s73 = sphi 0, %s72
      %s87 = sphi 0, %s73
      %s91 = sphi 0, %s91
      %s93 = sphi 0, %s91
      %s94 = sphi 0, %s93
      %s108 = sphi 0, %s94
      %s112 = sphi 0, %s112
      %s114 = sphi 0, %s112
      %s115 = sphi 0, %s114
      %s129 = sphi 0, %s115
      %s133 = sphi 0, %s133
      %s135 = sphi 0, %s133
      %s136 = sphi 0, %s135
      %s150 = sphi 0, %s136
      %s156 = sphi 0, %s158
      %s159 = sphi 0, %s156
      %s160 = sphi 0, %s159
      %s176 = sphi 0, %s160
    $region4: #{sigma_block_pallas.1} parent=1 // loop_header_branch
      %18 = sbr.rel (%p16) target = $region8
    $region5: #{sigma_block_pallas.1} parent=1 // loop_body
      %s20 = ssub.s32 %s15, 1
      %s21 = ssub.s32 %s15, 2
      %s22 = sadd.s32 %s15, 1
      %s23 = ssub.s32 %s15, %s22
      %p24 = scmp.eq.s32.totalorder %s23, 0
      %s26 = sadd.s32 %s25, 1
      %s27 = scalar_select %p24, %s25, %s26
      %p30 = pneg %p24
      %p31 = scmp.eq.s32.totalorder %s15, 1
      %p32 = por %p30, %p31
      %p33 = scmp.ne.s32.totalorder %s25, %s28
      %p34 = scmp.eq.s32.totalorder %s15, 0
      %p35 = por %p33, %p34
      %p36 = scmp.ne.s32.totalorder %s25, %s28
      %p37 = scmp.eq.s32.totalorder %s20, 1
      %p38 = por %p36, %p37
      %p39 = scmp.ne.s32.totalorder %s28, %s29
      %p40 = scmp.eq.s32.totalorder %s20, 0
      %p41 = por %p39, %p40
      %p42 = scmp.ne.s32.totalorder %s28, %s29
      %p43 = scmp.eq.s32.totalorder %s21, 1
      %p44 = por %p42, %p43
      %p46 = scmp.ne.s32.totalorder %s29, %s45
      %p47 = scmp.eq.s32.totalorder %s21, 0
      %p48 = por %p46, %p47
      %s50 = sadd.s32 %s49, 1
      %p53 = scmp.eq.s32.totalorder %s15, 1
      %p54 = scmp.ne.s32.totalorder %s49, %s51
      %p55 = scmp.eq.s32.totalorder %s15, 0
      %p56 = por %p54, %p55
      %p57 = scmp.ne.s32.totalorder %s49, %s51
      %p58 = scmp.eq.s32.totalorder %s20, 1
      %p59 = por %p57, %p58
      %p60 = scmp.ne.s32.totalorder %s51, %s52
      %p61 = scmp.eq.s32.totalorder %s20, 0
      %p62 = por %p60, %p61
      %p63 = scmp.ne.s32.totalorder %s51, %s52
      %p64 = scmp.eq.s32.totalorder %s21, 1
      %p65 = por %p63, %p64
      %p67 = scmp.ne.s32.totalorder %s52, %s66
      %p68 = scmp.eq.s32.totalorder %s21, 0
      %p69 = por %p67, %p68
      %s71 = sadd.s32 %s70, 1
      %p74 = scmp.eq.s32.totalorder %s15, 1
      %p75 = scmp.ne.s32.totalorder %s70, %s72
      %p76 = scmp.eq.s32.totalorder %s15, 0
      %p77 = por %p75, %p76
      %p78 = scmp.ne.s32.totalorder %s70, %s72
      %p79 = scmp.eq.s32.totalorder %s20, 1
      %p80 = por %p78, %p79
      %p81 = scmp.ne.s32.totalorder %s72, %s73
      %p82 = scmp.eq.s32.totalorder %s20, 0
      %p83 = por %p81, %p82
      %p84 = scmp.ne.s32.totalorder %s72, %s73
      %p85 = scmp.eq.s32.totalorder %s21, 1
      %p86 = por %p84, %p85
      %p88 = scmp.ne.s32.totalorder %s73, %s87
      %p89 = scmp.eq.s32.totalorder %s21, 0
      %p90 = por %p88, %p89
      %s92 = sadd.s32 %s91, 1
      %p95 = scmp.eq.s32.totalorder %s15, 1
      %p96 = scmp.ne.s32.totalorder %s91, %s93
      %p97 = scmp.eq.s32.totalorder %s15, 0
      %p98 = por %p96, %p97
      %p99 = scmp.ne.s32.totalorder %s91, %s93
      %p100 = scmp.eq.s32.totalorder %s20, 1
      %p101 = por %p99, %p100
      %p102 = scmp.ne.s32.totalorder %s93, %s94
      %p103 = scmp.eq.s32.totalorder %s20, 0
      %p104 = por %p102, %p103
      %p105 = scmp.ne.s32.totalorder %s93, %s94
      %p106 = scmp.eq.s32.totalorder %s21, 1
      %p107 = por %p105, %p106
      %p109 = scmp.ne.s32.totalorder %s94, %s108
      %p110 = scmp.eq.s32.totalorder %s21, 0
      %p111 = por %p109, %p110
      %s113 = sadd.s32 %s112, 1
      %p116 = scmp.eq.s32.totalorder %s15, 1
      %p117 = scmp.ne.s32.totalorder %s112, %s114
      %p118 = scmp.eq.s32.totalorder %s15, 0
      %p119 = por %p117, %p118
      %p120 = scmp.ne.s32.totalorder %s112, %s114
      %p121 = scmp.eq.s32.totalorder %s20, 1
      %p122 = por %p120, %p121
      %p123 = scmp.ne.s32.totalorder %s114, %s115
      %p124 = scmp.eq.s32.totalorder %s20, 0
      %p125 = por %p123, %p124
      %p126 = scmp.ne.s32.totalorder %s114, %s115
      %p127 = scmp.eq.s32.totalorder %s21, 1
      %p128 = por %p126, %p127
      %p130 = scmp.ne.s32.totalorder %s115, %s129
      %p131 = scmp.eq.s32.totalorder %s21, 0
      %p132 = por %p130, %p131
      %s134 = sadd.s32 %s133, 1
      %p137 = scmp.eq.s32.totalorder %s15, 1
      %p138 = scmp.ne.s32.totalorder %s133, %s135
      %p139 = scmp.eq.s32.totalorder %s15, 0
      %p140 = por %p138, %p139
      %p141 = scmp.ne.s32.totalorder %s133, %s135
      %p142 = scmp.eq.s32.totalorder %s20, 1
      %p143 = por %p141, %p142
      %p144 = scmp.ne.s32.totalorder %s135, %s136
      %p145 = scmp.eq.s32.totalorder %s20, 0
      %p146 = por %p144, %p145
      %p147 = scmp.ne.s32.totalorder %s135, %s136
      %p148 = scmp.eq.s32.totalorder %s21, 1
      %p149 = por %p147, %p148
      %p151 = scmp.ne.s32.totalorder %s136, %s150
      %p152 = scmp.eq.s32.totalorder %s21, 0
      %p153 = por %p151, %p152
      %s154 = ssub.s32 %s15, %s22
      %p155 = scmp.eq.s32.totalorder %s154, 0
      %s157 = sadd.s32 %s156, 1
      %s158 = scalar_select %p155, %s156, %s157
      %p161 = pneg %p155
      %p162 = scmp.eq.s32.totalorder %s15, 1
      %p163 = por %p161, %p162
      %p164 = scmp.ne.s32.totalorder %s156, %s159
      %p165 = scmp.eq.s32.totalorder %s15, 0
      %p166 = por %p164, %p165
      %p167 = scmp.ne.s32.totalorder %s156, %s159
      %p168 = scmp.eq.s32.totalorder %s20, 1
      %p169 = por %p167, %p168
      %p170 = scmp.ne.s32.totalorder %s159, %s160
      %p171 = scmp.eq.s32.totalorder %s20, 0
      %p172 = por %p170, %p171
      %p173 = scmp.ne.s32.totalorder %s159, %s160
      %p174 = scmp.eq.s32.totalorder %s21, 1
      %p175 = por %p173, %p174
      %p177 = scmp.ne.s32.totalorder %s160, %s176
      %p178 = scmp.eq.s32.totalorder %s21, 0
      %p179 = por %p177, %p178
      %p180 = scmp.le.s32.totalorder 1, %s15
      %p181 = scmp.lt.s32.totalorder %s15, 3
      %p182 = pnand %p180, %p181
      %p183 = pneg %p182
      // Predicated region
      $region9: #{sigma_block_pallas.1} parent=5 // pred_check
        _
      $region10: #{sigma_block_pallas.1} parent=5 // pred_check_branch
        %185 = sbr.rel (%p182) target = $region12
      $region11: #{sigma_block_pallas.1} parent=5 // pred_region
        %s186 = ssub.s32 %s15, 1
        // Predicated region
        $region13: #{sigma_block_pallas.1} parent=11 // pred_check
          %p187 = pneg %p62
        $region14: #{sigma_block_pallas.1} parent=11 // pred_check_branch
          %189 = sbr.rel (%p187) target = $region16
        $region15: #{sigma_block_pallas.1} parent=11 // pred_region
          _
        $region16: #{sigma_block_pallas.1} parent=11 // pred_fallthru
          _
        // Predicated region
        $region17: #{sigma_block_pallas.1} parent=11 // pred_check
          %p190 = pneg %p83
        $region18: #{sigma_block_pallas.1} parent=11 // pred_check_branch
          %192 = sbr.rel (%p190) target = $region20
        $region19: #{sigma_block_pallas.1} parent=11 // pred_region
          _
        $region20: #{sigma_block_pallas.1} parent=11 // pred_fallthru
          _
        // Predicated region
        $region21: #{sigma_block_pallas.1} parent=11 // pred_check
          %p193 = pneg %p104
        $region22: #{sigma_block_pallas.1} parent=11 // pred_check_branch
          %195 = sbr.rel (%p193) target = $region24
        $region23: #{sigma_block_pallas.1} parent=11 // pred_region
          %s197 = ssub.s32 2048, 2048
          %198 = vsyncadd [#allocation3], %s197
          %s199 = sshll.u32 [#allocation2], 4
          %s200 = int_to_ptr.vmem [resolvable:$true] %s199
          %205 = dma.hbm_to_vmem [thread:$0]  %s3, 2048, %s200, [#allocation3], 128, 128, 8
        $region24: #{sigma_block_pallas.1} parent=11 // pred_fallthru
          _
        // Predicated region
        $region25: #{sigma_block_pallas.1} parent=11 // pred_check
          %p206 = pneg %p125
        $region26: #{sigma_block_pallas.1} parent=11 // pred_check_branch
          %208 = sbr.rel (%p206) target = $region28
        $region27: #{sigma_block_pallas.1} parent=11 // pred_region
          %s210 = ssub.s32 4096, 4096
          %211 = vsyncadd [#allocation6], %s210
          %s212 = sshll.u32 [#allocation5], 4
          %s213 = int_to_ptr.vmem [resolvable:$true] %s212
          %218 = dma.hbm_to_vmem [thread:$0]  %s4, 4096, %s213, [#allocation6], 128, 128, 8
        $region28: #{sigma_block_pallas.1} parent=11 // pred_fallthru
          _
        // Predicated region
        $region29: #{sigma_block_pallas.1} parent=11 // pred_check
          %p219 = pneg %p146
        $region30: #{sigma_block_pallas.1} parent=11 // pred_check_branch
          %221 = sbr.rel (%p219) target = $region32
        $region31: #{sigma_block_pallas.1} parent=11 // pred_region
          %s223 = ssub.s32 16, 16
          %224 = vsyncadd [#allocation4], %s223
          %s226 = sshll.u32 %s5, 4
          %s227 = int_to_ptr.vmem [resolvable:$true] %s226
          %229 = dma.vmem_to_smem %s227, 16, [#allocation7], [#allocation4]
        $region32: #{sigma_block_pallas.1} parent=11 // pred_fallthru
          _
      $region12: #{sigma_block_pallas.1} parent=5 // pred_fallthru
        _
      %p230 = scmp.lt.s32.totalorder %s15, 2
      // Predicated region
      $region33: #{sigma_block_pallas.1} parent=5 // pred_check
        %p231 = pneg %p230
      $region34: #{sigma_block_pallas.1} parent=5 // pred_check_branch
        %233 = sbr.rel (%p231) target = $region36
      $region35: #{sigma_block_pallas.1} parent=5 // pred_region
        // Predicated region
        $region37: #{sigma_block_pallas.1} parent=35 // pred_check
          %p234 = pneg %p35
        $region38: #{sigma_block_pallas.1} parent=35 // pred_check_branch
          %236 = sbr.rel (%p234) target = $region40
        $region39: #{sigma_block_pallas.1} parent=35 // pred_region
          %s237 = smul.u32 2, %s15
          %p238 = scmp.lt.s32.totalorder %s237, 3
          %s239 = scalar_select %p238, %s237, 3
          %s240 = smul.addr %s239, 8
          %s241 = scalar_lea.vmem %s0, %s240
          %s242 = smul.u32 2, %s15
        $region40: #{sigma_block_pallas.1} parent=35 // pred_fallthru
          _
      $region36: #{sigma_block_pallas.1} parent=5 // pred_fallthru
        _
      %p243 = scmp.le.s32.totalorder 1, %s15
      %p244 = scmp.lt.s32.totalorder %s15, 3
      %p245 = pnand %p243, %p244
      %p246 = pneg %p245
      // Predicated region
      $region41: #{sigma_block_pallas.1} parent=5 // pred_check
        _
      $region42: #{sigma_block_pallas.1} parent=5 // pred_check_branch
        %248 = sbr.rel (%p245) target = $region44
      $region43: #{sigma_block_pallas.1} parent=5 // pred_region
        %s249 = ssub.s32 %s15, 1
        // Predicated region
        $region45: #{sigma_block_pallas.1} parent=43 // pred_check
          %p250 = pneg %p104
        $region46: #{sigma_block_pallas.1} parent=43 // pred_check_branch
          %252 = sbr.rel (%p250) target = $region48
        $region47: #{sigma_block_pallas.1} parent=43 // pred_region
          %253 = dma.done [#allocation3], 2048
        $region48: #{sigma_block_pallas.1} parent=43 // pred_fallthru
          _
        // Predicated region
        $region49: #{sigma_block_pallas.1} parent=43 // pred_check
          %p254 = pneg %p125
        $region50: #{sigma_block_pallas.1} parent=43 // pred_check_branch
          %256 = sbr.rel (%p254) target = $region52
        $region51: #{sigma_block_pallas.1} parent=43 // pred_region
          %257 = dma.done [#allocation6], 4096
        $region52: #{sigma_block_pallas.1} parent=43 // pred_fallthru
          _
        // Predicated region
        $region53: #{sigma_block_pallas.1} parent=43 // pred_check
          %p258 = pneg %p146
        $region54: #{sigma_block_pallas.1} parent=43 // pred_check_branch
          %260 = sbr.rel (%p258) target = $region56
        $region55: #{sigma_block_pallas.1} parent=43 // pred_region
          %261 = dma.done [#allocation4], 16
        $region56: #{sigma_block_pallas.1} parent=43 // pred_fallthru
          _
        %262 = sfence
        %s263 = smul.u32 2, %s20
        %p264 = scmp.lt.s32.totalorder %s263, 3
        %s265 = scalar_select %p264, %s263, 3
        %s266 = smul.addr %s265, 8
        %s267 = scalar_lea.vmem %s0, %s266
        %p268 = pneg %p41
        %p269 = pneg %p38
        %p270 = pneg %p62
        %p271 = pneg %p59
        %p272 = pneg %p83
        %p273 = pneg %p80
        %p274 = pneg %p104
        %p275 = pneg %p101
        %p276 = pneg %p125
        %p277 = pneg %p122
        %p278 = pneg %p146
        %p279 = pneg %p143
        %p280 = pneg %p172
        %p281 = pneg %p169
        %s282 = smul.u32 2, %s20
        %p283 = scmp.lt.s32.totalorder %s282, 3
        %s284 = scalar_select %p283, %s282, 3
        %s285 = smul.addr %s284, 2
        %s286 = smul.addr %s285, 8
        %s287 = scalar_lea.vmem %s6, %s286
        %s288 = smul.u32 2, %s20
        %p289 = scmp.lt.s32.totalorder %s288, 3
        %s290 = scalar_select %p289, %s288, 3
        %s291 = smul.addr %s290, 8
        %s292 = scalar_lea.vmem %s0, %s291
        %s293 = smul.u32 2, %s20
        %s294 = smul.u32 2, %s20
        %p295 = scmp.lt.s32.totalorder %s294, 3
        %s296 = scalar_select %p295, %s294, 3
        %s297 = smul.addr %s296, 2
        %s298 = smul.addr %s297, 8
        %s299 = scalar_lea.vmem %s6, %s298
        %s300 = smul.u32 2, %s20
        %v302 = vld [vmem:[%s1] ss:$0 sm:$0xff]
        %v303 = vld [vmem:[%s1 + $0x1] ss:$0 sm:$0xff]
        %v304 = vld [vmem:[%s1 + $0x2] ss:$0 sm:$0xff]
        %s305 = scalar_lea.vmem %s1, 3
        %v306 = vld [vmem:[%s305] ss:$8 sm:$0x3]
        %s307 = scalar_lea.vmem %s1, 4
        %v308 = vld [vmem:[%s307] ss:$8 sm:$0x3]
        %s309 = sld [smem:[#allocation7]]
        %s310 = sld [smem:[#allocation7 + $0x1]]
        %s311 = sld [smem:[#allocation7 + $0x2]]
        %v312 = vld [vmem:[%s292] sm:$0xff]
        %v313 = vld [vmem:[%s292 + $0x8] sm:$0xff]
        %315 = vset.pattern.permute.xlu0 0
        %316 = vperm.xlu0 %315, %v312
        %v317 = vpop.permute.xlu0 %316
        %320 = vset.pattern.permute.xlu0 0
        %321 = vperm.xlu0 %320, %v313
        %v322 = vpop.permute.xlu0 %321
        %v324 = vmul.f32 %v317, %v302
        %v325 = vmul.f32 %v322, %v302
        %v326 = vadd.f32 %v324, %v303
        %v327 = vadd.f32 %v325, %v303
        %v328 = vand.u32 2147483647, %v326
        %vm329 = vcmp.le.f32.partialorder %v328, 0.7853982
        %vm330 = vcmp.lt.s32.totalorder %v326, 0
        %v331 = vand.u32 %v326, 2139095040
        %v332 = vshrl.u32 %v331, 23
        %v333 = vsub.s32 %v332, 127
        %v334 = vand.u32 2147483647, %v326
        %v335 = vand.u32 %v334, 8388607
        %v336 = vor.u32 %v335, 8388608
        %v337 = vsub.s32 0, %v336
        %v338 = vadd.s32 %v333, 1
        %vm339 = vcmp.gt.s32.totalorder %v338, 0
        %v340 = vsel %vm339, %v338, 0
        %v341 = vshrl.u32 %v340, 5
        %v342 = vand.u32 %v340, 31
        %v343 = vsub.s32 32, %v342
        %v344 = vshrl.u32 683565275, %v343
        %v345 = vshll.u32 683565275, %v342
        %v346 = vshrl.u32 2475754826, %v343
        %v347 = vor.u32 %v345, %v346
        %v348 = vshll.u32 2475754826, %v342
        %v349 = vshrl.u32 2131351028, %v343
        %v350 = vor.u32 %v348, %v349
        %v351 = vshll.u32 2131351028, %v342
        %v352 = vshrl.u32 2102212464, %v343
        %v353 = vor.u32 %v351, %v352
        %v354 = vshll.u32 2102212464, %v342
        %v355 = vshrl.u32 920167782, %v343
        %v356 = vor.u32 %v354, %v355
        %v357 = vshll.u32 920167782, %v342
        %v358 = vshrl.u32 1326507024, %v343
        %v359 = vor.u32 %v357, %v358
        %vm360 = vcmp.lt.s32.totalorder %v341, 1
        %vm361 = vcmp.lt.s32.totalorder %v341, 2
        %vm362 = vcmp.lt.s32.totalorder %v341, 3
        %vm363 = vcmp.lt.s32.totalorder %v341, 4
        %v364 = vsel %vm360, %v344, %v347
        %v365 = vsel %vm363, %v353, 2102212464
        %v366 = vsel %vm362, %v350, %v365
        %v367 = vsel %vm361, %v364, %v366
        %v368 = vsel %vm360, %v347, %v350
        %v369 = vsel %vm363, %v356, 920167782
        %v370 = vsel %vm362, %v353, %v369
        %v371 = vsel %vm361, %v368, %v370
        %v372 = vsel %vm360, %v350, %v353
        %v373 = vsel %vm363, %v359, 1326507024
        %v374 = vsel %vm362, %v356, %v373
        %v375 = vsel %vm361, %v372, %v374
        %v376 = vshll.u32 %v336, 8
        %v377 = vmul.u32.u64.compose %v376, %v375
        %v378 = vextract.low.u32 %v377
        %v379 = vextract.high.u32 %v377
        %v380 = vmul.u32.u64.compose %v376, %v371
        %v381 = vextract.low.u32 %v380
        %v382 = vextract.high.u32 %v380
        %v383 = vmul.u32 %v376, %v367
        %v384 = vadd.s32 %v379, %v381
        %vm385 = vc.u32 %v379, %v381
        %v386 = vadd.s32 %v382, 1
        %v387 = vsel %vm385, %v386, %v382
        %v388 = vadd.s32 %v383, %v387
        %v389 = vadd.s32 %v388, 536870912
        %v390 = vshrl.u32 %v389, 30
        %v391 = vshll.u32 %v390, 30
        %v392 = vsub.s32 %v388, %v391
        %vm393 = vcmp.lt.s32.totalorder %v392, 0
        %v394 = vsub.s32 0, %v392
        %v395 = vsel %vm393, %v394, %v392
        %v396 = vclz %v395
        %v397 = vsub.s32 %v396, 2
        %vm398 = vcmp.gt.s32.totalorder 0, %v397
        %v399 = vsel %vm398, 0, %v397
        %v400 = vsub.s32 32, %v399
        %v401 = vshll.u32 %v392, %v399
        %v402 = vshrl.u32 %v384, %v400
        %v403 = vor.u32 %v401, %v402
        %v404 = vsub.s32 4294967266, %v399
        %v405 = vadd.s32 %v404, 127
        %v406 = vshll.u32 %v405, 23
        %v407 = vor.u32 4788187, %v406
        %v408 = vand.u32 2147483647, %v407
        %v410 = vcvt.s32.f32 %v403
        %v411 = vmul.f32 %v410, %v408
        %v412 = vxor.u32 %v411, 2147483648
        %v413 = vsel %vm330, %v412, %v411
        %v414 = vsub.s32 4, %v390
        %v415 = vsel %vm330, %v414, %v390
        %v416 = vsel %vm329, %v326, %v413
        %v417 = vsel %vm329, 0, %v415
        %v418 = vcosq.f32.pop %v416
        %v419 = vsinq.f32.pop %v416
        %vm420 = vweird.f32 %v326
        %v421 = vadd.s32 %v417, 3
        %v422 = vand.u32 %v421, 3
        %vm423 = vcmp.lt.s32.totalorder %v422, 2
        %vm424 = vcmp.eq.s32.totalorder %v422, 0
        %v425 = vxor.u32 %v419, 2147483648
        %v426 = vsel %vm424, %v418, %v425
        %vm427 = vcmp.eq.s32.totalorder %v422, 2
        %v428 = vxor.u32 %v418, 2147483648
        %v429 = vsel %vm427, %v428, %v419
        %v430 = vsel %vm423, %v426, %v429
        %v431 = vsel %vm420, nan, %v430
        %v432 = vand.u32 2147483647, %v327
        %vm433 = vcmp.le.f32.partialorder %v432, 0.7853982
        %vm434 = vcmp.lt.s32.totalorder %v327, 0
        %v435 = vand.u32 %v327, 2139095040
        %v436 = vshrl.u32 %v435, 23
        %v437 = vsub.s32 %v436, 127
        %v438 = vand.u32 2147483647, %v327
        %v439 = vand.u32 %v438, 8388607
        %v440 = vor.u32 %v439, 8388608
        %v441 = vsub.s32 0, %v440
        %v442 = vadd.s32 %v437, 1
        %vm443 = vcmp.gt.s32.totalorder %v442, 0
        %v444 = vsel %vm443, %v442, 0
        %v445 = vshrl.u32 %v444, 5
        %v446 = vand.u32 %v444, 31
        %v447 = vsub.s32 32, %v446
        %v448 = vshrl.u32 683565275, %v447
        %v449 = vshll.u32 683565275, %v446
        %v450 = vshrl.u32 2475754826, %v447
        %v451 = vor.u32 %v449, %v450
        %v452 = vshll.u32 2475754826, %v446
        %v453 = vshrl.u32 2131351028, %v447
        %v454 = vor.u32 %v452, %v453
        %v455 = vshll.u32 2131351028, %v446
        %v456 = vshrl.u32 2102212464, %v447
        %v457 = vor.u32 %v455, %v456
        %v458 = vshll.u32 2102212464, %v446
        %v459 = vshrl.u32 920167782, %v447
        %v460 = vor.u32 %v458, %v459
        %v461 = vshll.u32 920167782, %v446
        %v462 = vshrl.u32 1326507024, %v447
        %v463 = vor.u32 %v461, %v462
        %vm464 = vcmp.lt.s32.totalorder %v445, 1
        %vm465 = vcmp.lt.s32.totalorder %v445, 2
        %vm466 = vcmp.lt.s32.totalorder %v445, 3
        %vm467 = vcmp.lt.s32.totalorder %v445, 4
        %v468 = vsel %vm464, %v448, %v451
        %v469 = vsel %vm467, %v457, 2102212464
        %v470 = vsel %vm466, %v454, %v469
        %v471 = vsel %vm465, %v468, %v470
        %v472 = vsel %vm464, %v451, %v454
        %v473 = vsel %vm467, %v460, 920167782
        %v474 = vsel %vm466, %v457, %v473
        %v475 = vsel %vm465, %v472, %v474
        %v476 = vsel %vm464, %v454, %v457
        %v477 = vsel %vm467, %v463, 1326507024
        %v478 = vsel %vm466, %v460, %v477
        %v479 = vsel %vm465, %v476, %v478
        %v480 = vshll.u32 %v440, 8
        %v481 = vmul.u32.u64.compose %v480, %v479
        %v482 = vextract.low.u32 %v481
        %v483 = vextract.high.u32 %v481
        %v484 = vmul.u32.u64.compose %v480, %v475
        %v485 = vextract.low.u32 %v484
        %v486 = vextract.high.u32 %v484
        %v487 = vmul.u32 %v480, %v471
        %v488 = vadd.s32 %v483, %v485
        %vm489 = vc.u32 %v483, %v485
        %v490 = vadd.s32 %v486, 1
        %v491 = vsel %vm489, %v490, %v486
        %v492 = vadd.s32 %v487, %v491
        %v493 = vadd.s32 %v492, 536870912
        %v494 = vshrl.u32 %v493, 30
        %v495 = vshll.u32 %v494, 30
        %v496 = vsub.s32 %v492, %v495
        %vm497 = vcmp.lt.s32.totalorder %v496, 0
        %v498 = vsub.s32 0, %v496
        %v499 = vsel %vm497, %v498, %v496
        %v500 = vclz %v499
        %v501 = vsub.s32 %v500, 2
        %vm502 = vcmp.gt.s32.totalorder 0, %v501
        %v503 = vsel %vm502, 0, %v501
        %v504 = vsub.s32 32, %v503
        %v505 = vshll.u32 %v496, %v503
        %v506 = vshrl.u32 %v488, %v504
        %v507 = vor.u32 %v505, %v506
        %v508 = vsub.s32 4294967266, %v503
        %v509 = vadd.s32 %v508, 127
        %v510 = vshll.u32 %v509, 23
        %v511 = vor.u32 4788187, %v510
        %v512 = vand.u32 2147483647, %v511
        %v514 = vcvt.s32.f32 %v507
        %v515 = vmul.f32 %v514, %v512
        %v516 = vxor.u32 %v515, 2147483648
        %v517 = vsel %vm434, %v516, %v515
        %v518 = vsub.s32 4, %v494
        %v519 = vsel %vm434, %v518, %v494
        %v520 = vsel %vm433, %v327, %v517
        %v521 = vsel %vm433, 0, %v519
        %v522 = vcosq.f32.pop %v520
        %v523 = vsinq.f32.pop %v520
        %vm524 = vweird.f32 %v327
        %v525 = vadd.s32 %v521, 3
        %v526 = vand.u32 %v525, 3
        %vm527 = vcmp.lt.s32.totalorder %v526, 2
        %vm528 = vcmp.eq.s32.totalorder %v526, 0
        %v529 = vxor.u32 %v523, 2147483648
        %v530 = vsel %vm528, %v522, %v529
        %vm531 = vcmp.eq.s32.totalorder %v526, 2
        %v532 = vxor.u32 %v522, 2147483648
        %v533 = vsel %vm531, %v532, %v523
        %v534 = vsel %vm527, %v530, %v533
        %v535 = vsel %vm524, nan, %v534
        %v536 = vpack.c.bf16 %v535, %v431
        %v537 = vld [vmem:[%s2] sm:$0xf]
        %v538 = vld [vmem:[%s2 + $0x4] sm:$0xf]
        %v539 = vld [vmem:[%s2 + $0x8] sm:$0xf]
        %v540 = vld [vmem:[%s2 + $0xc] sm:$0xf]
        %v541 = vld [vmem:[%s2 + $0x10] sm:$0xf]
        %v542 = vld [vmem:[%s2 + $0x14] sm:$0xf]
        %v543 = vld [vmem:[%s2 + $0x18] sm:$0xf]
        %v544 = vld [vmem:[%s2 + $0x1c] sm:$0xf]
        %v553 = vunpack.c.l.b16 %v537
        %v554 = vunpack.c.l.b16 %v538
        %v555 = vunpack.c.l.b16 %v539
        %v556 = vunpack.c.l.b16 %v540
        %v557 = vunpack.c.l.b16 %v541
        %v558 = vunpack.c.l.b16 %v542
        %v559 = vunpack.c.l.b16 %v543
        %v560 = vunpack.c.l.b16 %v544
        %v561 = vpack.c.b16 %v554, %v553
        %v562 = vpack.c.b16 %v556, %v555
        %v563 = vpack.c.b16 %v558, %v557
        %v564 = vpack.c.b16 %v560, %v559
        %vm569 = vcmask 523264
        %v571 = vsel %vm569, %v536, 0
        %573 = vmatprep.subr.bf16.mxu0 0
        %574 = vmatpush1.bf16.msra.mxu0 %v561
        %575 = vmatprep.subr.bf16.mxu0 0
        %576 = vmatpush1.bf16.msra.mxu0 %v562
        %577 = vmatprep.subr.bf16.mxu0 0
        %578 = vmatpush1.bf16.msra.mxu0 %v563
        %579 = vmatprep.subr.bf16.mxu0 0
        %580 = vmatpush1.bf16.msra.mxu0 %v564
        %581 = vmatprep.subr.bf16.mxu0 0
        %582 = vmatpush1.bf16.msra.mxu0 0
        %583 = vmatprep.subr.bf16.mxu0 0
        %584 = vmatpush1.bf16.msra.mxu0 0
        %585 = vmatprep.subr.bf16.mxu0 0
        %586 = vmatpush1.bf16.msra.mxu0 0
        %587 = vmatprep.subr.bf16.mxu0 0
        %588 = vmatpush1.bf16.msra.mxu0 0
        %589 = vmatprep.subr.bf16.mxu0 0
        %590 = vmatpush1.bf16.msra.mxu0 0
        %591 = vmatprep.subr.bf16.mxu0 0
        %592 = vmatpush1.bf16.msra.mxu0 0
        %593 = vmatprep.subr.bf16.mxu0 0
        %594 = vmatpush1.bf16.msra.mxu0 0
        %595 = vmatprep.subr.bf16.mxu0 0
        %596 = vmatpush1.bf16.msra.mxu0 0
        %597 = vmatprep.subr.bf16.mxu0 0
        %598 = vmatpush1.bf16.msra.mxu0 0
        %599 = vmatprep.subr.bf16.mxu0 0
        %600 = vmatpush1.bf16.msra.mxu0 0
        %601 = vmatprep.subr.bf16.mxu0 0
        %602 = vmatpush1.bf16.msra.mxu0 0
        %603 = vmatprep.subr.bf16.mxu0 0
        %604 = vmatpush1.bf16.msra.mxu0 0
        %605 = vmatprep.mubr.bf16.mxu0 0
        %606 = vmatmul.mubr.bf16.gmra.mrb[0].mxu0 %v571
        %v607 = vpop.f32.mrb[0].mxu0
        %v608 = vadd.f32 %v304, %v607
        %v609 = vpop.f32.mrb[0].mxu0
        %v610 = vpop.f32.mrb[0].mxu0
        %v611 = vadd.f32 %v304, %v610
        %v612 = vpop.f32.mrb[0].mxu0
        %613 = vdwg.mxu0
        %vm614 = vcmp.ge.f32.partialorder %v608, 0.0
        %vm615 = vcmp.ge.f32.partialorder %v611, 0.0
        %v616 = vstv %s309
        %v617 = vmul.f32 %v616, %v608
        %v618 = vmul.f32 %v616, %v611
        %v619 = vsel %vm614, %v608, %v617
        %v620 = vsel %vm615, %v611, %v618
        %v621 = vpack.c.bf16 %v620, %v619
        %v622 = vld [vmem:[#allocation2] sm:$0xff]
        %v623 = vld [vmem:[#allocation2 + $0x8] sm:$0xff]
        %v624 = vld [vmem:[#allocation2 + $0x10] sm:$0xff]
        %v625 = vld [vmem:[#allocation2 + $0x18] sm:$0xff]
        %v626 = vld [vmem:[#allocation2 + $0x20] sm:$0xff]
        %v627 = vld [vmem:[#allocation2 + $0x28] sm:$0xff]
        %v628 = vld [vmem:[#allocation2 + $0x30] sm:$0xff]
        %v629 = vld [vmem:[#allocation2 + $0x38] sm:$0xff]
        %v630 = vld [vmem:[#allocation2 + $0x40] sm:$0xff]
        %v631 = vld [vmem:[#allocation2 + $0x48] sm:$0xff]
        %v632 = vld [vmem:[#allocation2 + $0x50] sm:$0xff]
        %v633 = vld [vmem:[#allocation2 + $0x58] sm:$0xff]
        %v634 = vld [vmem:[#allocation2 + $0x60] sm:$0xff]
        %v635 = vld [vmem:[#allocation2 + $0x68] sm:$0xff]
        %v636 = vld [vmem:[#allocation2 + $0x70] sm:$0xff]
        %v637 = vld [vmem:[#allocation2 + $0x78] sm:$0xff]
        %v639 = vlaneseq
        %v640 = vshrl.u32 %v639, 7
        %v641 = vsub.s32 0, %v640
        %v642 = vrot.slane %v306, %v641
        %v643 = vlaneseq
        %v644 = vshrl.u32 %v643, 7
        %v645 = vsub.s32 1, %v644
        %v646 = vrot.slane %v306, %v645
        %v665 = vunpack.c.l.b16 %v622
        %v666 = vunpack.c.h.b16 %v622
        %v667 = vunpack.c.l.b16 %v623
        %v668 = vunpack.c.h.b16 %v623
        %v669 = vunpack.c.l.b16 %v624
        %v670 = vunpack.c.h.b16 %v624
        %v671 = vunpack.c.l.b16 %v625
        %v672 = vunpack.c.h.b16 %v625
        %v673 = vunpack.c.l.b16 %v626
        %v674 = vunpack.c.h.b16 %v626
        %v675 = vunpack.c.l.b16 %v627
        %v676 = vunpack.c.h.b16 %v627
        %v677 = vunpack.c.l.b16 %v628
        %v678 = vunpack.c.h.b16 %v628
        %v679 = vunpack.c.l.b16 %v629
        %v680 = vunpack.c.h.b16 %v629
        %v681 = vunpack.c.l.b16 %v630
        %v682 = vunpack.c.h.b16 %v630
        %v683 = vunpack.c.l.b16 %v631
        %v684 = vunpack.c.h.b16 %v631
        %v685 = vunpack.c.l.b16 %v632
        %v686 = vunpack.c.h.b16 %v632
        %v687 = vunpack.c.l.b16 %v633
        %v688 = vunpack.c.h.b16 %v633
        %v689 = vunpack.c.l.b16 %v634
        %v690 = vunpack.c.h.b16 %v634
        %v691 = vunpack.c.l.b16 %v635
        %v692 = vunpack.c.h.b16 %v635
        %v693 = vunpack.c.l.b16 %v636
        %v694 = vunpack.c.h.b16 %v636
        %v695 = vunpack.c.l.b16 %v637
        %v696 = vunpack.c.h.b16 %v637
        %v697 = vpack.c.b16 %v667, %v665
        %v698 = vpack.c.b16 %v668, %v666
        %v699 = vpack.c.b16 %v671, %v669
        %v700 = vpack.c.b16 %v672, %v670
        %v701 = vpack.c.b16 %v675, %v673
        %v702 = vpack.c.b16 %v676, %v674
        %v703 = vpack.c.b16 %v679, %v677
        %v704 = vpack.c.b16 %v680, %v678
        %v705 = vpack.c.b16 %v683, %v681
        %v706 = vpack.c.b16 %v684, %v682
        %v707 = vpack.c.b16 %v687, %v685
        %v708 = vpack.c.b16 %v688, %v686
        %v709 = vpack.c.b16 %v691, %v689
        %v710 = vpack.c.b16 %v692, %v690
        %v711 = vpack.c.b16 %v695, %v693
        %v712 = vpack.c.b16 %v696, %v694
        %729 = vmatprep.subr.bf16.mxu0 %v698
        %730 = vmatpush1.bf16.msra.mxu0 %v697
        %731 = vmatprep.subr.bf16.mxu0 %v700
        %732 = vmatpush1.bf16.msra.mxu0 %v699
        %733 = vmatprep.subr.bf16.mxu0 %v702
        %734 = vmatpush1.bf16.msra.mxu0 %v701
        %735 = vmatprep.subr.bf16.mxu0 %v704
        %736 = vmatpush1.bf16.msra.mxu0 %v703
        %737 = vmatprep.subr.bf16.mxu0 %v706
        %738 = vmatpush1.bf16.msra.mxu0 %v705
        %739 = vmatprep.subr.bf16.mxu0 %v708
        %740 = vmatpush1.bf16.msra.mxu0 %v707
        %741 = vmatprep.subr.bf16.mxu0 %v710
        %742 = vmatpush1.bf16.msra.mxu0 %v709
        %743 = vmatprep.subr.bf16.mxu0 %v712
        %744 = vmatpush1.bf16.msra.mxu0 %v711
        %745 = vmatprep.subr.bf16.mxu0 0
        %746 = vmatpush1.bf16.msra.mxu0 0
        %747 = vmatprep.subr.bf16.mxu0 0
        %748 = vmatpush1.bf16.msra.mxu0 0
        %749 = vmatprep.subr.bf16.mxu0 0
        %750 = vmatpush1.bf16.msra.mxu0 0
        %751 = vmatprep.subr.bf16.mxu0 0
        %752 = vmatpush1.bf16.msra.mxu0 0
        %753 = vmatprep.subr.bf16.mxu0 0
        %754 = vmatpush1.bf16.msra.mxu0 0
        %755 = vmatprep.subr.bf16.mxu0 0
        %756 = vmatpush1.bf16.msra.mxu0 0
        %757 = vmatprep.subr.bf16.mxu0 0
        %758 = vmatpush1.bf16.msra.mxu0 0
        %759 = vmatprep.subr.bf16.mxu0 0
        %760 = vmatpush1.bf16.msra.mxu0 0
        %761 = vmatprep.mubr.bf16.mxu0 0
        %762 = vmatmul.mubr.bf16.gmra.mrb[0].mxu0 %v621
        %v763 = vpop.f32.mrb[0].mxu0
        %v764 = vadd.f32 %v642, %v763
        %v765 = vpop.f32.mrb[0].mxu0
        %v766 = vadd.f32 %v646, %v765
        %v767 = vpop.f32.mrb[0].mxu0
        %v768 = vadd.f32 %v642, %v767
        %v769 = vpop.f32.mrb[0].mxu0
        %v770 = vadd.f32 %v646, %v769
        %771 = vdwg.mxu0
        %vm772 = vcmp.ge.f32.partialorder %v764, 0.0
        %vm773 = vcmp.ge.f32.partialorder %v766, 0.0
        %vm774 = vcmp.ge.f32.partialorder %v768, 0.0
        %vm775 = vcmp.ge.f32.partialorder %v770, 0.0
        %v776 = vstv %s310
        %v777 = vmul.f32 %v776, %v764
        %v778 = vmul.f32 %v776, %v766
        %v779 = vmul.f32 %v776, %v768
        %v780 = vmul.f32 %v776, %v770
        %v781 = vsel %vm772, %v764, %v777
        %v782 = vsel %vm773, %v766, %v778
        %v783 = vsel %vm774, %v768, %v779
        %v784 = vsel %vm775, %v770, %v780
        %v785 = vpack.c.bf16 %v783, %v781
        %v786 = vpack.c.bf16 %v784, %v782
        %v787 = vld [vmem:[#allocation5] sm:$0xff]
        %v788 = vld [vmem:[#allocation5 + $0x8] sm:$0xff]
        %v789 = vld [vmem:[#allocation5 + $0x10] sm:$0xff]
        %v790 = vld [vmem:[#allocation5 + $0x18] sm:$0xff]
        %v791 = vld [vmem:[#allocation5 + $0x20] sm:$0xff]
        %v792 = vld [vmem:[#allocation5 + $0x28] sm:$0xff]
        %v793 = vld [vmem:[#allocation5 + $0x30] sm:$0xff]
        %v794 = vld [vmem:[#allocation5 + $0x38] sm:$0xff]
        %v795 = vld [vmem:[#allocation5 + $0x40] sm:$0xff]
        %v796 = vld [vmem:[#allocation5 + $0x48] sm:$0xff]
        %v797 = vld [vmem:[#allocation5 + $0x50] sm:$0xff]
        %v798 = vld [vmem:[#allocation5 + $0x58] sm:$0xff]
        %v799 = vld [vmem:[#allocation5 + $0x60] sm:$0xff]
        %v800 = vld [vmem:[#allocation5 + $0x68] sm:$0xff]
        %v801 = vld [vmem:[#allocation5 + $0x70] sm:$0xff]
        %v802 = vld [vmem:[#allocation5 + $0x78] sm:$0xff]
        %v803 = vld [vmem:[#allocation5 + $0x80] sm:$0xff]
        %v804 = vld [vmem:[#allocation5 + $0x88] sm:$0xff]
        %v805 = vld [vmem:[#allocation5 + $0x90] sm:$0xff]
        %v806 = vld [vmem:[#allocation5 + $0x98] sm:$0xff]
        %v807 = vld [vmem:[#allocation5 + $0xa0] sm:$0xff]
        %v808 = vld [vmem:[#allocation5 + $0xa8] sm:$0xff]
        %v809 = vld [vmem:[#allocation5 + $0xb0] sm:$0xff]
        %v810 = vld [vmem:[#allocation5 + $0xb8] sm:$0xff]
        %v811 = vld [vmem:[#allocation5 + $0xc0] sm:$0xff]
        %v812 = vld [vmem:[#allocation5 + $0xc8] sm:$0xff]
        %v813 = vld [vmem:[#allocation5 + $0xd0] sm:$0xff]
        %v814 = vld [vmem:[#allocation5 + $0xd8] sm:$0xff]
        %v815 = vld [vmem:[#allocation5 + $0xe0] sm:$0xff]
        %v816 = vld [vmem:[#allocation5 + $0xe8] sm:$0xff]
        %v817 = vld [vmem:[#allocation5 + $0xf0] sm:$0xff]
        %v818 = vld [vmem:[#allocation5 + $0xf8] sm:$0xff]
        %v820 = vlaneseq
        %v821 = vshrl.u32 %v820, 7
        %v822 = vsub.s32 0, %v821
        %v823 = vrot.slane %v308, %v822
        %v824 = vlaneseq
        %v825 = vshrl.u32 %v824, 7
        %v826 = vsub.s32 1, %v825
        %v827 = vrot.slane %v308, %v826
        %v862 = vunpack.c.l.b16 %v787
        %v863 = vunpack.c.h.b16 %v787
        %v864 = vunpack.c.l.b16 %v788
        %v865 = vunpack.c.h.b16 %v788
        %v866 = vunpack.c.l.b16 %v789
        %v867 = vunpack.c.h.b16 %v789
        %v868 = vunpack.c.l.b16 %v790
        %v869 = vunpack.c.h.b16 %v790
        %v870 = vunpack.c.l.b16 %v791
        %v871 = vunpack.c.h.b16 %v791
        %v872 = vunpack.c.l.b16 %v792
        %v873 = vunpack.c.h.b16 %v792
        %v874 = vunpack.c.l.b16 %v793
        %v875 = vunpack.c.h.b16 %v793
        %v876 = vunpack.c.l.b16 %v794
        %v877 = vunpack.c.h.b16 %v794
        %v878 = vunpack.c.l.b16 %v795
        %v879 = vunpack.c.h.b16 %v795
        %v880 = vunpack.c.l.b16 %v796
        %v881 = vunpack.c.h.b16 %v796
        %v882 = vunpack.c.l.b16 %v797
        %v883 = vunpack.c.h.b16 %v797
        %v884 = vunpack.c.l.b16 %v798
        %v885 = vunpack.c.h.b16 %v798
        %v886 = vunpack.c.l.b16 %v799
        %v887 = vunpack.c.h.b16 %v799
        %v888 = vunpack.c.l.b16 %v800
        %v889 = vunpack.c.h.b16 %v800
        %v890 = vunpack.c.l.b16 %v801
        %v891 = vunpack.c.h.b16 %v801
        %v892 = vunpack.c.l.b16 %v802
        %v893 = vunpack.c.h.b16 %v802
        %v894 = vunpack.c.l.b16 %v803
        %v895 = vunpack.c.h.b16 %v803
        %v896 = vunpack.c.l.b16 %v804
        %v897 = vunpack.c.h.b16 %v804
        %v898 = vunpack.c.l.b16 %v805
        %v899 = vunpack.c.h.b16 %v805
        %v900 = vunpack.c.l.b16 %v806
        %v901 = vunpack.c.h.b16 %v806
        %v902 = vunpack.c.l.b16 %v807
        %v903 = vunpack.c.h.b16 %v807
        %v904 = vunpack.c.l.b16 %v808
        %v905 = vunpack.c.h.b16 %v808
        %v906 = vunpack.c.l.b16 %v809
        %v907 = vunpack.c.h.b16 %v809
        %v908 = vunpack.c.l.b16 %v810
        %v909 = vunpack.c.h.b16 %v810
        %v910 = vunpack.c.l.b16 %v811
        %v911 = vunpack.c.h.b16 %v811
        %v912 = vunpack.c.l.b16 %v812
        %v913 = vunpack.c.h.b16 %v812
        %v914 = vunpack.c.l.b16 %v813
        %v915 = vunpack.c.h.b16 %v813
        %v916 = vunpack.c.l.b16 %v814
        %v917 = vunpack.c.h.b16 %v814
        %v918 = vunpack.c.l.b16 %v815
        %v919 = vunpack.c.h.b16 %v815
        %v920 = vunpack.c.l.b16 %v816
        %v921 = vunpack.c.h.b16 %v816
        %v922 = vunpack.c.l.b16 %v817
        %v923 = vunpack.c.h.b16 %v817
        %v924 = vunpack.c.l.b16 %v818
        %v925 = vunpack.c.h.b16 %v818
        %v926 = vpack.c.b16 %v864, %v862
        %v927 = vpack.c.b16 %v865, %v863
        %v928 = vpack.c.b16 %v868, %v866
        %v929 = vpack.c.b16 %v869, %v867
        %v930 = vpack.c.b16 %v872, %v870
        %v931 = vpack.c.b16 %v873, %v871
        %v932 = vpack.c.b16 %v876, %v874
        %v933 = vpack.c.b16 %v877, %v875
        %v934 = vpack.c.b16 %v880, %v878
        %v935 = vpack.c.b16 %v881, %v879
        %v936 = vpack.c.b16 %v884, %v882
        %v937 = vpack.c.b16 %v885, %v883
        %v938 = vpack.c.b16 %v888, %v886
        %v939 = vpack.c.b16 %v889, %v887
        %v940 = vpack.c.b16 %v892, %v890
        %v941 = vpack.c.b16 %v893, %v891
        %v942 = vpack.c.b16 %v896, %v894
        %v943 = vpack.c.b16 %v897, %v895
        %v944 = vpack.c.b16 %v900, %v898
        %v945 = vpack.c.b16 %v901, %v899
        %v946 = vpack.c.b16 %v904, %v902
        %v947 = vpack.c.b16 %v905, %v903
        %v948 = vpack.c.b16 %v908, %v906
        %v949 = vpack.c.b16 %v909, %v907
        %v950 = vpack.c.b16 %v912, %v910
        %v951 = vpack.c.b16 %v913, %v911
        %v952 = vpack.c.b16 %v916, %v914
        %v953 = vpack.c.b16 %v917, %v915
        %v954 = vpack.c.b16 %v920, %v918
        %v955 = vpack.c.b16 %v921, %v919
        %v956 = vpack.c.b16 %v924, %v922
        %v957 = vpack.c.b16 %v925, %v923
        %990 = vmatprep.subr.bf16.mxu0 %v927
        %991 = vmatpush1.bf16.msra.mxu0 %v926
        %992 = vmatprep.subr.bf16.mxu0 %v929
        %993 = vmatpush1.bf16.msra.mxu0 %v928
        %994 = vmatprep.subr.bf16.mxu0 %v931
        %995 = vmatpush1.bf16.msra.mxu0 %v930
        %996 = vmatprep.subr.bf16.mxu0 %v933
        %997 = vmatpush1.bf16.msra.mxu0 %v932
        %998 = vmatprep.subr.bf16.mxu0 %v935
        %999 = vmatpush1.bf16.msra.mxu0 %v934
        %1000 = vmatprep.subr.bf16.mxu0 %v937
        %1001 = vmatpush1.bf16.msra.mxu0 %v936
        %1002 = vmatprep.subr.bf16.mxu0 %v939
        %1003 = vmatpush1.bf16.msra.mxu0 %v938
        %1004 = vmatprep.subr.bf16.mxu0 %v941
        %1005 = vmatpush1.bf16.msra.mxu0 %v940
        %1006 = vmatprep.subr.bf16.mxu0 %v943
        %1007 = vmatpush1.bf16.msra.mxu0 %v942
        %1008 = vmatprep.subr.bf16.mxu0 %v945
        %1009 = vmatpush1.bf16.msra.mxu0 %v944
        %1010 = vmatprep.subr.bf16.mxu0 %v947
        %1011 = vmatpush1.bf16.msra.mxu0 %v946
        %1012 = vmatprep.subr.bf16.mxu0 %v949
        %1013 = vmatpush1.bf16.msra.mxu0 %v948
        %1014 = vmatprep.subr.bf16.mxu0 %v951
        %1015 = vmatpush1.bf16.msra.mxu0 %v950
        %1016 = vmatprep.subr.bf16.mxu0 %v953
        %1017 = vmatpush1.bf16.msra.mxu0 %v952
        %1018 = vmatprep.subr.bf16.mxu0 %v955
        %1019 = vmatpush1.bf16.msra.mxu0 %v954
        %1020 = vmatprep.subr.bf16.mxu0 %v957
        %1021 = vmatpush1.bf16.msra.mxu0 %v956
        %1022 = vmatprep.mubr.bf16.mxu0 %v786
        %1023 = vmatmul.mubr.bf16.gmra.mrb[0].mxu0 %v785
        %v1024 = vpop.f32.mrb[0].mxu0
        %v1025 = vadd.f32 %v823, %v1024
        %v1026 = vpop.f32.mrb[0].mxu0
        %v1027 = vadd.f32 %v827, %v1026
        %v1028 = vpop.f32.mrb[0].mxu0
        %v1029 = vadd.f32 %v823, %v1028
        %v1030 = vpop.f32.mrb[0].mxu0
        %v1031 = vadd.f32 %v827, %v1030
        %1032 = vdwg.mxu0
        %vm1033 = vcmp.ge.f32.partialorder %v1025, 0.0
        %vm1034 = vcmp.ge.f32.partialorder %v1027, 0.0
        %vm1035 = vcmp.ge.f32.partialorder %v1029, 0.0
        %vm1036 = vcmp.ge.f32.partialorder %v1031, 0.0
        %v1037 = vstv %s311
        %v1038 = vmul.f32 %v1037, %v1025
        %v1039 = vmul.f32 %v1037, %v1027
        %v1040 = vmul.f32 %v1037, %v1029
        %v1041 = vmul.f32 %v1037, %v1031
        %v1042 = vsel %vm1033, %v1025, %v1038
        %v1043 = vsel %vm1034, %v1027, %v1039
        %v1044 = vsel %vm1035, %v1029, %v1040
        %v1045 = vsel %vm1036, %v1031, %v1041
        %1046 = vst [vmem:[%s299] sm:$0xff] %v1042
        %1047 = vst [vmem:[%s299 + $0x8] sm:$0xff] %v1043
        %1048 = vst [vmem:[%s299 + $0x10] sm:$0xff] %v1044
        %1049 = vst [vmem:[%s299 + $0x18] sm:$0xff] %v1045
        %s1050 = smul.u32 2, %s20
        %p1051 = scmp.lt.s32.totalorder %s1050, 3
        %s1052 = scalar_select %p1051, %s1050, 3
        %s1053 = smul.addr %s1052, 2
        %s1054 = smul.addr %s1053, 8
        %s1055 = scalar_lea.vmem %s6, %s1054
        // Predicated region
        $region57: #{sigma_block_pallas.1} parent=43 // pred_check
          %p1056 = pneg %p169
        $region58: #{sigma_block_pallas.1} parent=43 // pred_check_branch
          %1058 = sbr.rel (%p1056) target = $region60
        $region59: #{sigma_block_pallas.1} parent=43 // pred_region
          %s1059 = smul.u32 2, %s20
        $region60: #{sigma_block_pallas.1} parent=43 // pred_fallthru
          _
      $region44: #{sigma_block_pallas.1} parent=5 // pred_fallthru
        _
      %p1060 = scmp.le.s32.totalorder 2, %s15
      // Predicated region
      $region61: #{sigma_block_pallas.1} parent=5 // pred_check
        %p1061 = pneg %p1060
      $region62: #{sigma_block_pallas.1} parent=5 // pred_check_branch
        %1063 = sbr.rel (%p1061) target = $region64
      $region63: #{sigma_block_pallas.1} parent=5 // pred_region
        %s1064 = ssub.s32 %s15, 2
        // Predicated region
        $region65: #{sigma_block_pallas.1} parent=63 // pred_check
          %p1065 = pneg %p175
        $region66: #{sigma_block_pallas.1} parent=63 // pred_check_branch
          %1067 = sbr.rel (%p1065) target = $region68
        $region67: #{sigma_block_pallas.1} parent=63 // pred_region
          %s1068 = smul.u32 2, %s21
          %p1069 = scmp.lt.s32.totalorder %s1068, 3
          %s1070 = scalar_select %p1069, %s1068, 3
          %s1071 = smul.addr %s1070, 2
          %s1072 = smul.addr %s1071, 8
          %s1073 = scalar_lea.vmem %s6, %s1072
        $region68: #{sigma_block_pallas.1} parent=63 // pred_fallthru
          _
      $region64: #{sigma_block_pallas.1} parent=5 // pred_fallthru
        _
    $region6: #{sigma_block_pallas.1} parent=1 // loop_footer
      %s19 = sadd.s32 1, %s15
    $region7: #{sigma_block_pallas.1} parent=1 // loop_footer_branch
      %14 = sbr.rel target = $region3
    $region8: #{sigma_block_pallas.1} parent=1 // loop_exit
      _
    %1074 = vsyncpa [#allocation3], 1
    %s1075 = scalar_lea.sflag [#allocation3], 1
    %1076 = vsyncpa %s1075, 1
    %1077 = vsyncpa [#allocation6], 1
    %1078 = vsyncpa [#allocation4], 1
    %s1079 = scalar_lea.sflag [#allocation4], 1
    %1080 = vsyncpa %s1079, 1

</llo_original>
